<compile_context>
chip_gen: v7x
topology: tpu7x:2x2x1
jax: 0.10.0
libtpu: 0.0.40
codegen_flags: <defaults>
</compile_context>

<pallas_src>
import jax
import jax.numpy as jnp
from jax.experimental import pallas as pl
from jax.experimental.pallas import tpu as pltpu


def _biasnorm_kernel(scale_ref, bias_ref, x_ref, o_ref):
    # scale_ref: (1,) f32 in SMEM   == exp(log_scale) * sqrt(C_true)
    # bias_ref : (1, C_pad)         broadcasts over rows
    # x_ref    : (TM, C_pad) tile
    x = x_ref[...].astype(jnp.float32)
    b = bias_ref[...].astype(jnp.float32)
    d = x - b
    ss = jnp.sum(d * d, axis=-1, keepdims=True)          # (TM, 1); padded lanes add 0
    s = jax.lax.rsqrt(ss) * scale_ref[0]                  # == rsqrt(mean) * exp(log_scale)
    o_ref[...] = (x * s).astype(o_ref.dtype)


def _round_down(v, m):
    return (v // m) * m


def bias_norm(x, bias, log_scale, *, tm=None, tile_bytes=2 * 1024 * 1024):
    """BiasNorm forward, channel_dim = -1 (last axis).

    x: (..., C)  bias: (C,)  log_scale: scalar
    """
    orig_shape = x.shape
    C = orig_shape[-1]
    assert bias.shape == (C,)
    rows = 1
    for s in orig_shape[:-1]:
        rows *= s
    x2 = x.reshape(rows, C)

    dtype_size = jnp.dtype(x.dtype).itemsize

    # --- lane-dense channel axis: pad C up to a multiple of 128 ---------------
    LANES = 128
    c_pad = ((C + LANES - 1) // LANES) * LANES
    if c_pad != C:
        x2 = jnp.pad(x2, ((0, 0), (0, c_pad - C)))
        bias_p = jnp.pad(bias, (0, c_pad - C))
    else:
        bias_p = bias
    bias2 = bias_p.reshape(1, c_pad)

    # --- row tile: ~tile_bytes per x tile, aligned to the sublane quantum -----
    sublane = max(8, 32 // dtype_size)     # 8 for f32, 16 for bf16, 32 for 8-bit
    if tm is None:
        tm = max(sublane, _round_down(tile_bytes // (c_pad * dtype_size), sublane))
    if tm >= rows:
        tm = rows                          # full extent is always a legal block
    else:
        tm = max(sublane, _round_down(tm, sublane))
    grid = (pl.cdiv(rows, tm),)            # tail tile handled by masked writes

    # --- fold exp(log_scale) and the 1/C of the mean into one scalar ----------
    scale = (jnp.exp(jnp.asarray(log_scale, jnp.float32))
             * jnp.sqrt(jnp.float32(C))).reshape(1)

    out = pl.pallas_call(
        _biasnorm_kernel,
        out_shape=jax.ShapeDtypeStruct((rows, c_pad), x.dtype),
        grid_spec=pltpu.PrefetchScalarGridSpec(
            num_scalar_prefetch=0,
            grid=grid,
            in_specs=[
                pl.BlockSpec(memory_space=pltpu.MemorySpace.SMEM),        # scale scalar
                pl.BlockSpec((1, c_pad), lambda i: (0, 0)),               # bias (resident)
                pl.BlockSpec((tm, c_pad), lambda i: (i, 0)),              # x tile (streamed)
            ],
            out_specs=pl.BlockSpec((tm, c_pad), lambda i: (i, 0)),
        ),
        compiler_params=pltpu.CompilerParams(
            dimension_semantics=("parallel",),
            # Tiles are sized to ~2 MiB so double-buffered x + out stays far
            # under this on every generation (v5e/v6e/v7x).
            vmem_limit_bytes=32 * 1024 * 1024,
        ),
    )(scale, bias2, x2)

    if c_pad != C:
        out = out[:, :C]
    return out.reshape(orig_shape)


def bias_norm_ref(x, bias, log_scale):
    xf = x.astype(jnp.float32)
    bf = bias.astype(jnp.float32)
    scales = jnp.mean((xf - bf) ** 2, axis=-1, keepdims=True) ** (-0.5) * jnp.exp(log_scale)
    return (xf * scales).astype(x.dtype)


# TODO(synk): only the forward pass is implemented; the custom autograd backward
# (BiasNormFunction.backward) and store_output_for_backprop are out of scope here.

if __name__ == "__main__":
    key = jax.random.PRNGKey(0)
    kx, kb, kx2, kb2 = jax.random.split(key, 4)

    # Small shape consistent with the module (channel_dim = -1): (B, T, C).
    B, T, C = 2, 8, 32
    x = jax.random.normal(kx, (B, T, C), dtype=jnp.float32)
    bias = 0.1 * jax.random.normal(kb, (C,), dtype=jnp.float32)
    log_scale = jnp.float32(0.05)

    y = jax.block_until_ready(bias_norm(x, bias, log_scale))
    y_ref = bias_norm_ref(x, bias, log_scale)
    assert y.shape == x.shape and y.dtype == x.dtype
    assert jnp.allclose(y, y_ref, atol=1e-5, rtol=1e-5), "mismatch vs reference (case 1)"

    # Second check: multi-step grid with a partial tail tile (rows=120, tm=32)
    # and a channel count that is not a multiple of 128 (C=200 -> padded 256).
    B2, T2, C2 = 3, 40, 200
    x_b = jax.random.normal(kx2, (B2, T2, C2), dtype=jnp.float32)
    bias_b = 0.1 * jax.random.normal(kb2, (C2,), dtype=jnp.float32)
    y_b = jax.block_until_ready(bias_norm(x_b, bias_b, log_scale, tm=32))
    y_b_ref = bias_norm_ref(x_b, bias_b, log_scale)
    assert jnp.allclose(y_b, y_b_ref, atol=1e-5, rtol=1e-5), "mismatch vs reference (case 2)"

    print("KERNEL_OK")
</pallas_src>

<mosaic_0001>
module attributes {stable_mosaic.version = 11 : i64} {
  func.func @_biasnorm_kernel(%arg0: i32, %arg1: memref<1xf32, #tpu.memory_space<smem>>, %arg2: memref<1x128xf32, #tpu.memory_space<vmem>>, %arg3: memref<16x128xf32, #tpu.memory_space<vmem>>, %arg4: memref<16x128xf32, #tpu.memory_space<vmem>>) attributes {dimension_semantics = [#tpu.dimension_semantics<parallel>], iteration_bounds = array<i64: 1>, scalar_prefetch = 0 : i64, scratch_operands = 0 : i64, tpu.core_type = #tpu.core_type<tc>, window_params = [{transform_indices = @transform_0, window_bounds = array<i64: 1>}, {pipeline_mode = #tpu.pipeline_mode<synchronous>, transform_indices = @transform_1, window_bounds = array<i64: 1, 128>}, {transform_indices = @transform_2, window_bounds = array<i64: 16, 128>}, {transform_indices = @transform_3, window_bounds = array<i64: 16, 128>}]} {
    %c0 = arith.constant 0 : index
    %c0_0 = arith.constant 0 : index
    %0 = vector.load %arg3[%c0, %c0_0] : memref<16x128xf32, #tpu.memory_space<vmem>>, vector<16x128xf32>
    %c0_1 = arith.constant 0 : index
    %c0_2 = arith.constant 0 : index
    %1 = vector.load %arg2[%c0_1, %c0_2] : memref<1x128xf32, #tpu.memory_space<vmem>>, vector<1x128xf32>
    %2 = vector.broadcast %1 : vector<1x128xf32> to vector<16x128xf32>
    %3 = arith.subf %0, %2 : vector<16x128xf32>
    %4 = arith.mulf %3, %3 : vector<16x128xf32>
    %cst = arith.constant dense<0.000000e+00> : vector<16xf32>
    %5 = vector.multi_reduction <add>, %4, %cst [1] : vector<16x128xf32> to vector<16xf32>
    %6 = vector.shape_cast %5 : vector<16xf32> to vector<16x1xf32>
    %7 = math.rsqrt %6 : vector<16x1xf32>
    %c0_3 = arith.constant 0 : index
    %8 = memref.load %arg1[%c0_3] : memref<1xf32, #tpu.memory_space<smem>>
    %9 = vector.broadcast %8 : f32 to vector<16x1xf32>
    %10 = arith.mulf %7, %9 : vector<16x1xf32>
    %11 = vector.broadcast %10 : vector<16x1xf32> to vector<16x128xf32>
    %12 = arith.mulf %0, %11 : vector<16x128xf32>
    %c0_4 = arith.constant 0 : index
    %c0_5 = arith.constant 0 : index
    %13 = vector.load %arg4[%c0_4, %c0_5] : memref<16x128xf32, #tpu.memory_space<vmem>>, vector<16x128xf32>
    tpu.vector_store %arg4[%c0_4, %c0_5], %12 {strides = array<i32>} : memref<16x128xf32, #tpu.memory_space<vmem>>, vector<16x128xf32>,
    return
  }
  func.func @transform_0(%arg0: i32) -> i32 {
    %c0_i32 = arith.constant 0 : i32
    %c0_i32_0 = arith.constant 0 : i32
    return %c0_i32 : i32
  }
  func.func @transform_1(%arg0: i32) -> (i32, i32) {
    %c0_i32 = arith.constant 0 : i32
    %c0_i32_0 = arith.constant 0 : i32
    %c0_i32_1 = arith.constant 0 : i32
    return %c0_i32, %c0_i32_0 : i32, i32
  }
  func.func @transform_2(%arg0: i32) -> (i32, i32) {
    %c0_i32 = arith.constant 0 : i32
    %c0_i32_0 = arith.constant 0 : i32
    return %arg0, %c0_i32 : i32, i32
  }
  func.func @transform_3(%arg0: i32) -> (i32, i32) {
    %c0_i32 = arith.constant 0 : i32
    %c0_i32_0 = arith.constant 0 : i32
    return %arg0, %c0_i32 : i32, i32
  }
}

</mosaic_0001>

<llo_original>
// kernel: tpu_custom_call.1
$region0: #{tpu_custom_call.1}
  #allocation0 [shape = 'u32[]', space=smem, size = 0x4, offset = 0x4, fixed_abs, tag = 'smem constant byte address 0x4 - core index']
  #allocation1 [shape = 'u32[144,128]{1,0:T(1,128)}', space=vmem, size = 0x12000, scoped, tag = 'internal scratch']
  #allocation2 [shape = 'f32[1]{0:T(128)S(6)}', space=smem, size = 0x200, scoped, tag = 'scoped memory for tpu_custom_call.1']
  %s0 = inlined_call_operand.<no memory space> [shape: f32[1], index: 0, kind: input, shape index: {}]
  %s1 = inlined_call_operand.vmem [shape: f32[1,128], index: 1, kind: input, shape index: {}]
  %s2 = inlined_call_operand.hbm [shape: f32[16,128], index: 2, kind: input, shape index: {}]
  %s3 = inlined_call_operand.hbm [shape: f32[16,128], index: 3, kind: output, shape index: {}]
  %s4 = sld [smem:[#allocation0]]
  $region26: #{tpu_custom_call.1} parent=0
    _
  %s6 = ssub.s32 1, %s4
  %s7 = scalar_select 0, %s6, %s4
  %8 = sst [smem:[#allocation2]] %s0
  $region1: #{tpu_custom_call.1} parent=0
    #allocation3 [shape = 'u8[8192]{0}', space=vmem, size = 0x2000, scoped, tag = 'input window, operand 2, single buffered']
    #allocation4 [shape = 's32[1]{0}', space=sflag, size = 0x4, scoped, tag = 'scoped memory for tpu_custom_call.1']
    #allocation5 [shape = 's32[1]{0}', space=sflag, size = 0x4, scoped, tag = 'scoped memory for tpu_custom_call.1']
    #allocation6 [shape = 'u8[8192]{0}', space=vmem, size = 0x2000, scoped, tag = 'output window, operand 0, single buffered']
    %9 = vsyncpa [#allocation4], 0
    %10 = vsyncpa [#allocation5], 0
    // Predicated region
    $region2: #{tpu_custom_call.1} parent=1 // pred_check
      _
    $region3: #{tpu_custom_call.1} parent=1 // pred_check_branch
      %12 = sbr.rel (0) target = $region5
    $region4: #{tpu_custom_call.1} parent=1 // pred_region
      _
    $region5: #{tpu_custom_call.1} parent=1 // pred_fallthru
      _
    // Predicated region
    $region6: #{tpu_custom_call.1} parent=1 // pred_check
      _
    $region7: #{tpu_custom_call.1} parent=1 // pred_check_branch
      %14 = sbr.rel (0) target = $region9
    $region8: #{tpu_custom_call.1} parent=1 // pred_region
      _
    $region9: #{tpu_custom_call.1} parent=1 // pred_fallthru
      _
    // Predicated region
    $region10: #{tpu_custom_call.1} parent=1 // pred_check
      _
    $region11: #{tpu_custom_call.1} parent=1 // pred_check_branch
      %16 = sbr.rel (0) target = $region13
    $region12: #{tpu_custom_call.1} parent=1 // pred_region
      %s18 = ssub.s32 256, 256
      %19 = vsyncadd [#allocation4], %s18
      %s20 = sshll.u32 [#allocation3], 4
      %s21 = int_to_ptr.vmem [resolvable:$true] %s20
      %26 = dma.hbm_to_vmem [thread:$0]  %s2, 256, %s21, [#allocation4], 128, 128, 8
    $region13: #{tpu_custom_call.1} parent=1 // pred_fallthru
      _
    // Predicated region
    $region14: #{tpu_custom_call.1} parent=1 // pred_check
      _
    $region15: #{tpu_custom_call.1} parent=1 // pred_check_branch
      %28 = sbr.rel (0) target = $region17
    $region16: #{tpu_custom_call.1} parent=1 // pred_region
      %29 = dma.done [#allocation4], 256
    $region17: #{tpu_custom_call.1} parent=1 // pred_fallthru
      _
    %v30 = vld [vmem:[#allocation3] sm:$0xff]
    %v31 = vld [vmem:[#allocation3 + $0x8] sm:$0xff]
    %v32 = vld [vmem:[%s1] sm:$0x1]
    %v34 = vlaneseq
    %v35 = vshrl.u32 %v34, 7
    %v36 = vsub.s32 0, %v35
    %v37 = vrot.slane %v32, %v36
    %v39 = vsub.f32 %v30, %v37
    %v40 = vsub.f32 %v31, %v37
    %v41 = vmul.f32 %v39, %v39
    %v42 = vmul.f32 %v40, %v40
    %43 = vadd.xlane.f32.xlu0 %v41
    %v44 = vpop.xlane.xlu0 %43
    %45 = vadd.xlane.f32.xlu0 %v42
    %v46 = vpop.xlane.xlu0 %45
    %v47 = vrsqrt.pop %v44
    %v48 = vrsqrt.pop %v46
    %s49 = sld [smem:[#allocation2]]
    %v50 = vstv %s49
    %v51 = vmul.f32 %v47, %v50
    %v52 = vmul.f32 %v48, %v50
    %v53 = vmul.f32 %v30, %v51
    %v54 = vmul.f32 %v31, %v52
    %55 = vst [vmem:[#allocation6] sm:$0xff] %v53
    %56 = vst [vmem:[#allocation6 + $0x8] sm:$0xff] %v54
    // Predicated region
    $region18: #{tpu_custom_call.1} parent=1 // pred_check
      _
    $region19: #{tpu_custom_call.1} parent=1 // pred_check_branch
      %58 = sbr.rel (0) target = $region21
    $region20: #{tpu_custom_call.1} parent=1 // pred_region
      %s60 = ssub.s32 256, 256
      %61 = vsyncadd [#allocation5], %s60
      %s62 = sshll.u32 [#allocation6], 4
      %s63 = int_to_ptr.vmem [resolvable:$true] %s62
      %68 = dma.vmem_to_hbm [thread:$0]  %s63, 256, %s3, [#allocation5], 128, 128, 8
    $region21: #{tpu_custom_call.1} parent=1 // pred_fallthru
      _
    // Predicated region
    $region22: #{tpu_custom_call.1} parent=1 // pred_check
      _
    $region23: #{tpu_custom_call.1} parent=1 // pred_check_branch
      %70 = sbr.rel (0) target = $region25
    $region24: #{tpu_custom_call.1} parent=1 // pred_region
      %71 = dma.done [#allocation5], 256
    $region25: #{tpu_custom_call.1} parent=1 // pred_fallthru
      _
    %72 = vsyncpa [#allocation4], 1
    %73 = vsyncpa [#allocation5], 1

</llo_original>
